<compile_context>
chip_gen: v7x
topology: tpu7x:2x2x1
jax: 0.10.0
libtpu: 0.0.40
codegen_flags: <defaults>
</compile_context>

<pallas_src>
import functools
import jax
import jax.numpy as jnp
from jax.experimental import pallas as pl
from jax.experimental.pallas import tpu as pltpu

# ----------------------------- problem sizes --------------------------------
N_REFLN = 256      # reflections
S_MC    = 8        # mc_samples
D_META  = 16       # metadata features
N_IMG   = 8        # images
H_HKL   = 64       # unique (rasu, hkl) entries in the surrogate posterior

_LOG_2PI = float(jnp.log(2.0 * jnp.pi))
_MAX_TILE = 8192   # reflections per grid step (lane axis); ~3 MiB VMEM/step


# ------------------------------ fused kernel --------------------------------
def merging_kernel(md_ref, w_ref, eps_ref, cols_ref, z_ref, sf_ref, si_ref,
                   out_ref, img_ref):
    t = md_ref.shape[1]        # tile (reflections, lane axis)
    h = z_ref.shape[1]         # hkl table size
    n_img = img_ref.shape[1]

    # SMEM scalars: floats [b_loc_eff, b_sig_eff, intensity_inv_std], int [n]
    b_loc = sf_ref[0]
    b_sig = sf_ref[1]
    i_istd = sf_ref[2]
    n_valid = si_ref[0]

    g = pl.program_id(1)

    @pl.when(g == 0)
    def _init():
        img_ref[...] = jnp.zeros_like(img_ref)

    # ---- scale model head: one small MXU matmul (std folded into weights) ---
    head = jnp.dot(w_ref[...], md_ref[...],
                   preferred_element_type=jnp.float32)              # (8, t)
    loc_s = head[0:1, :] + b_loc                                     # (1, t)
    raw_s = head[1:2, :] + b_sig
    sig_s = jax.nn.softplus(raw_s) + 1e-3
    z_scale = jax.nn.softplus(loc_s + sig_s * eps_ref[...])          # (S, t)
    # analytic KL( N(loc, sig) || N(0,1) ) per reflection
    scale_kl = 0.5 * (sig_s * sig_s + loc_s * loc_s - 1.0) - jnp.log(sig_s)

    # ---- lane-dense per-reflection columns (4, t) ----------------------------
    cols = cols_ref[...]
    hkl_idx = cols[0:1, :].astype(jnp.int32)   # small ints: f32<->i32 exact
    iobs = cols[1:2, :] * i_istd
    sig = cols[2:3, :] * i_istd
    img_id = cols[3:4, :].astype(jnp.int32)

    # global row index and validity mask (int compare, exact)
    blk = pl.program_id(0) * pl.num_programs(1) + g
    lane = jax.lax.broadcasted_iota(jnp.int32, (1, t), 1) + blk * t
    valid = lane < n_valid                                           # (1, t)

    # ---- rac.gather as a bf16 one-hot matmul on the MXU ---------------------
    hkl_iota = jax.lax.broadcasted_iota(jnp.int32, (h, t), 0)
    onehot_hkl = (hkl_iota == hkl_idx).astype(jnp.bfloat16)          # (H, t)
    f_g = jnp.dot(z_ref[...].astype(jnp.bfloat16), onehot_hkl,
                  preferred_element_type=jnp.float32)                # (S, t)

    # Ipred = Scale * |F|^2
    ipred = (f_g * f_g) * z_scale                                    # (S, t)

    # ---- Normal log-likelihood; per-reflection reciprocal (S-fold cheaper) --
    sig_safe = jnp.where(valid, sig, 1.0)        # keep padded rows finite
    inv_sig = pl.reciprocal(sig_safe, approx=False)                  # (1, t)
    resid = (iobs - ipred) * inv_sig
    ll = -0.5 * resid * resid - jnp.log(sig_safe) - 0.5 * _LOG_2PI   # (S, t)
    ll = jnp.where(valid, ll, 0.0)

    # ---- per-image scatter-add via one bf16 matmul (contract reflections) ---
    img_iota = jax.lax.broadcasted_iota(jnp.int32, (n_img, t), 0)
    onehot_img = ((img_iota == img_id) & valid).astype(jnp.bfloat16)
    img_ref[0] += jax.lax.dot_general(
        onehot_img, ll.astype(jnp.bfloat16),
        (((1,), (1,)), ((), ())),
        preferred_element_type=jnp.float32)                          # (I, S)

    # ---- channel-major per-reflection outputs (lane-dense stores) -----------
    out_ref[0:1, :] = jnp.mean(ipred, axis=0, keepdims=True)         # ipred_avg
    out_ref[1:2, :] = scale_kl


# --------------------------------- wrapper -----------------------------------
@functools.partial(jax.jit, static_argnames=("n_images", "tile", "num_cores"))
def merging_forward(metadata, iobs, sigiobs, hkl_in, rasu_id, image_id,
                    w_scale, b_scale, loc_f, scale_f, eps_scale, eps_f,
                    n_images=N_IMG, tile=None, num_cores=1):
    # TODO(synk): single-rasu assumption; rasu_id is unused in the flat gather.
    del rasu_id
    n, d = metadata.shape
    s = eps_scale.shape[1]
    h = loc_f.shape[0]

    # ---- tile selection: large lane-dense tiles, 128-aligned -----------------
    if tile is None:
        tile = _MAX_TILE
    if n <= tile:
        tile = max(128, -(-n // 128) * 128)
    chunk = tile * num_cores
    pad_n = -(-n // chunk) * chunk
    pad = pad_n - n
    steps = pad_n // chunk                   # grid steps per core
    grid = (num_cores, steps)                # ("parallel", "arbitrary")

    # ---- standardization stats (global reductions stay in XLA) --------------
    md32 = metadata.astype(jnp.float32)
    md_mean = jnp.mean(md32, axis=0)                                  # (D,)
    md_istd = 1.0 / (jnp.std(md32, axis=0) + 1e-6)                    # (D,)
    i_istd = 1.0 / (jnp.std(iobs.astype(jnp.float32)) + 1e-6)         # scalar

    # fold metadata standardization into effective head weights / bias
    w_eff = (w_scale.astype(jnp.float32) * md_istd[:, None]).T        # (2, D)
    b_eff = b_scale.astype(jnp.float32).reshape(-1) - w_eff @ md_mean  # (2,)
    w_pad = jnp.zeros((8, d), jnp.float32).at[:2].set(w_eff)          # (8, D)

    # surrogate posterior MC samples z = loc + scale*eps and MC KL (hoisted)
    eps32 = eps_f.astype(jnp.float32)                                 # (S, H)
    z_smp = loc_f[None, :] + scale_f[None, :] * eps32                 # (S, H)
    kl_hkl = jnp.mean(0.5 * (z_smp * z_smp - eps32 * eps32)
                      - jnp.log(scale_f)[None, :], axis=0)            # (H,)

    # lane-dense packed per-reflection columns (4, pad_n):
    #   [flat hkl index, iobs, sigiobs, image_id]
    hkl_flat = hkl_in[:, 0] * 16 + hkl_in[:, 1] * 4 + hkl_in[:, 2]
    cols = jnp.stack([hkl_flat.astype(jnp.float32),
                      iobs.astype(jnp.float32),
                      sigiobs.astype(jnp.float32),
                      image_id.astype(jnp.float32)], axis=0)          # (4, n)
    cols = jnp.pad(cols, ((0, 0), (0, pad)))                          # (4, pad_n)
    md_t = jnp.pad(md32, ((0, pad), (0, 0))).T                        # (D, pad_n)
    eps_t = jnp.pad(eps_scale.astype(jnp.float32), ((0, pad), (0, 0))).T

    scalars_f = jnp.stack([b_eff[0], b_eff[1], i_istd])               # SMEM f32
    scalars_i = jnp.array([n], jnp.int32)                             # SMEM i32

    refl, img_acc = pl.pallas_call(
        merging_kernel,
        out_shape=(
            jax.ShapeDtypeStruct((2, pad_n), jnp.float32),            # [ipred_avg; scale_kl]
            jax.ShapeDtypeStruct((num_cores, n_images, s), jnp.float32),
        ),
        grid=grid,
        in_specs=[
            pl.BlockSpec((d, tile), lambda c, g: (0, c * steps + g)),  # metadata^T
            pl.BlockSpec((8, d),    lambda c, g: (0, 0)),              # head weights
            pl.BlockSpec((s, tile), lambda c, g: (0, c * steps + g)),  # eps (scale)
            pl.BlockSpec((4, tile), lambda c, g: (0, c * steps + g)),  # packed cols
            pl.BlockSpec((s, h),    lambda c, g: (0, 0)),              # z samples
            pl.BlockSpec(memory_space=pltpu.MemorySpace.SMEM),         # f32 scalars
            pl.BlockSpec(memory_space=pltpu.MemorySpace.SMEM),         # int scalars
        ],
        out_specs=(
            pl.BlockSpec((2, tile),          lambda c, g: (0, c * steps + g)),
            pl.BlockSpec((1, n_images, s),   lambda c, g: (c, 0, 0)),
        ),
        compiler_params=pltpu.CompilerParams(
            dimension_semantics=("parallel", "arbitrary")),
    )(md_t, w_pad, eps_t, cols, z_smp, scalars_f, scalars_i)

    # average_by_images: per-image sum over reflections & samples / count / S
    counts = jnp.bincount(image_id, length=n_images).astype(jnp.float32)
    ll_sum = img_acc.sum(axis=0).sum(axis=1)                          # (n_images,)
    ll_avg = jnp.where(counts > 0,
                       ll_sum / jnp.maximum(counts, 1.0) / s, jnp.nan)

    return {
        "ipred_avg": refl[0, :n],
        "loss_nll": -jnp.nanmean(ll_avg),
        "loss_kl": kl_hkl.mean(),
        "scale_kl_div": refl[1, :n].mean(),
        "hkl": hkl_in,
    }


# --------------------------------- driver ------------------------------------
if __name__ == "__main__":
    key = jax.random.PRNGKey(0)
    keys = jax.random.split(key, 10)

    metadata = jax.random.normal(keys[0], (N_REFLN, D_META), jnp.float32)
    iobs = jnp.abs(jax.random.normal(keys[1], (N_REFLN,), jnp.float32)) * 5.0 + 0.1
    sigiobs = jax.random.uniform(keys[2], (N_REFLN,), jnp.float32, 0.5, 1.5)
    hkl_in = jax.random.randint(keys[3], (N_REFLN, 3), 0, 4, jnp.int32)
    rasu_id = jnp.zeros((N_REFLN,), jnp.int32)
    image_id = jnp.repeat(jnp.arange(N_IMG, dtype=jnp.int32), N_REFLN // N_IMG)

    # deterministic "parameters"
    w_scale = 0.05 * jax.random.normal(keys[4], (D_META, 2), jnp.float32)
    b_scale = jnp.array([[0.5, -1.0]], jnp.float32)
    loc_f = 1.0 + 0.1 * jax.random.normal(keys[5], (H_HKL,), jnp.float32)
    scale_f = 0.1 * jnp.ones((H_HKL,), jnp.float32)

    # deterministic reparameterization noise (rsample)
    eps_scale = jax.random.normal(keys[6], (N_REFLN, S_MC), jnp.float32)
    eps_f = jax.random.normal(keys[7], (S_MC, H_HKL), jnp.float32)

    # num_cores=1 on v5e/v6e (single TensorCore); set num_cores=2 on v7x to
    # shard the reflection loop across both TensorCores.
    out = merging_forward(metadata, iobs, sigiobs, hkl_in, rasu_id, image_id,
                          w_scale, b_scale, loc_f, scale_f, eps_scale, eps_f,
                          n_images=N_IMG, tile=None, num_cores=1)
    jax.block_until_ready(out)

    assert out["ipred_avg"].shape == (N_REFLN,)
    assert out["hkl"].shape == (N_REFLN, 3)
    assert jnp.isfinite(out["loss_nll"]) and jnp.isfinite(out["loss_kl"])
    assert jnp.isfinite(out["scale_kl_div"])
    assert bool(jnp.all(jnp.isfinite(out["ipred_avg"])))
    print("KERNEL_OK")
</pallas_src>

<mosaic_0001>
module attributes {stable_mosaic.version = 11 : i64} {
  func.func private @main(%arg0: i32) attributes {dimension_semantics = [#tpu.dimension_semantics<core_parallel>], iteration_bounds = array<i64: 2>, tpu.core_type = #tpu.core_type<sc_scalar_subcore>, window_params = []} {
    return
  }
}

module attributes {stable_mosaic.version = 11 : i64} {
  func.func private @main(%arg0: i32) attributes {dimension_semantics = [#tpu.dimension_semantics<core_parallel>], iteration_bounds = array<i64: 2>, tpu.core_type = #tpu.core_type<sc_scalar_subcore>, window_params = []} {
    return
  }
}

module attributes {stable_mosaic.version = 11 : i64} {
  func.func @merging_kernel(%arg0: i32, %arg1: i32, %arg2: memref<16x256xf32, #tpu.memory_space<vmem>>, %arg3: memref<8x16xf32, #tpu.memory_space<vmem>>, %arg4: memref<8x256xf32, #tpu.memory_space<vmem>>, %arg5: memref<4x256xf32, #tpu.memory_space<vmem>>, %arg6: memref<8x64xf32, #tpu.memory_space<vmem>>, %arg7: memref<3xf32, #tpu.memory_space<smem>>, %arg8: memref<1xi32, #tpu.memory_space<smem>>, %arg9: memref<2x256xf32, #tpu.memory_space<vmem>>, %arg10: memref<1x8x8xf32, #tpu.memory_space<vmem>>) attributes {dimension_semantics = [#tpu.dimension_semantics<parallel>, #tpu.dimension_semantics<arbitrary>], iteration_bounds = array<i64: 1, 1>, scalar_prefetch = 0 : i64, scratch_operands = 0 : i64, tpu.core_type = #tpu.core_type<tc>, window_params = [{transform_indices = @transform_0, window_bounds = array<i64: 16, 256>}, {pipeline_mode = #tpu.pipeline_mode<synchronous>, transform_indices = @transform_1, window_bounds = array<i64: 8, 16>}, {transform_indices = @transform_2, window_bounds = array<i64: 8, 256>}, {transform_indices = @transform_3, window_bounds = array<i64: 4, 256>}, {pipeline_mode = #tpu.pipeline_mode<synchronous>, transform_indices = @transform_4, window_bounds = array<i64: 8, 64>}, {transform_indices = @transform_5, window_bounds = array<i64: 3>}, {transform_indices = @transform_6, window_bounds = array<i64: 1>}, {transform_indices = @transform_7, window_bounds = array<i64: 2, 256>}, {transform_indices = @transform_8, window_bounds = array<i64: 1, 8, 8>}]} {
    %c0 = arith.constant 0 : index
    %0 = memref.load %arg7[%c0] : memref<3xf32, #tpu.memory_space<smem>>
    %c1 = arith.constant 1 : index
    %1 = memref.load %arg7[%c1] : memref<3xf32, #tpu.memory_space<smem>>
    %c2 = arith.constant 2 : index
    %2 = memref.load %arg7[%c2] : memref<3xf32, #tpu.memory_space<smem>>
    %c0_0 = arith.constant 0 : index
    %3 = memref.load %arg8[%c0_0] : memref<1xi32, #tpu.memory_space<smem>>
    %c0_i32 = arith.constant 0 : i32
    %4 = arith.cmpi eq, %arg1, %c0_i32 : i32
    %5 = arith.extui %4 : i1 to i32
    %c0_i32_1 = arith.constant 0 : i32
    %6 = arith.cmpi ne, %5, %c0_i32_1 : i32
    scf.if %6 {
      %cst_37 = arith.constant 0.000000e+00 : f32
      %131 = vector.broadcast %cst_37 : f32 to vector<1x8x8xf32>
      %c0_38 = arith.constant 0 : index
      %c0_39 = arith.constant 0 : index
      %c0_40 = arith.constant 0 : index
      %132 = vector.load %arg10[%c0_38, %c0_39, %c0_40] : memref<1x8x8xf32, #tpu.memory_space<vmem>>, vector<1x8x8xf32>
      tpu.vector_store %arg10[%c0_38, %c0_39, %c0_40], %131 {strides = array<i32>} : memref<1x8x8xf32, #tpu.memory_space<vmem>>, vector<1x8x8xf32>,
    } else {
    }
    %c0_2 = arith.constant 0 : index
    %c0_3 = arith.constant 0 : index
    %7 = vector.load %arg3[%c0_2, %c0_3] : memref<8x16xf32, #tpu.memory_space<vmem>>, vector<8x16xf32>
    %c0_4 = arith.constant 0 : index
    %c0_5 = arith.constant 0 : index
    %8 = vector.load %arg2[%c0_4, %c0_5] : memref<16x256xf32, #tpu.memory_space<vmem>>, vector<16x256xf32>
    %cst = arith.constant dense<0.000000e+00> : vector<8x256xf32>
    %9 = tpu.matmul %7, %8, %cst {dimension_numbers = #tpu.dot_dimension_numbers<[1], [0], [0], [1], [0, 0, 1, 1], [], []>} : vector<8x16xf32>, vector<16x256xf32>, vector<8x256xf32> -> vector<8x256xf32>
    %10 = vector.extract_strided_slice %9 {offsets = [0, 0], sizes = [1, 256], strides = [1, 1]} : vector<8x256xf32> to vector<1x256xf32>
    %11 = vector.broadcast %0 : f32 to vector<1x256xf32>
    %12 = arith.addf %10, %11 : vector<1x256xf32>
    %13 = vector.extract_strided_slice %9 {offsets = [1, 0], sizes = [1, 256], strides = [1, 1]} : vector<8x256xf32> to vector<1x256xf32>
    %14 = vector.broadcast %1 : f32 to vector<1x256xf32>
    %15 = arith.addf %13, %14 : vector<1x256xf32>
    %cst_6 = arith.constant 0.000000e+00 : f32
    %16 = vector.broadcast %cst_6 : f32 to vector<1x256xf32>
    %17 = arith.maximumf %15, %16 : vector<1x256xf32>
    %18 = vector.broadcast %cst_6 : f32 to vector<1x256xf32>
    %19 = arith.subf %15, %18 : vector<1x256xf32>
    %20 = arith.cmpf one, %19, %19 : vector<1x256xf32>
    %21 = vector.broadcast %cst_6 : f32 to vector<1x256xf32>
    %22 = arith.addf %15, %21 : vector<1x256xf32>
    %23 = math.absf %19 : vector<1x256xf32>
    %cst_7 = arith.constant 0.000000e+00 : f32
    %24 = vector.broadcast %cst_7 : f32 to vector<1x256xf32>
    %25 = arith.subf %24, %23 : vector<1x256xf32>
    %26 = math.exp %25 : vector<1x256xf32>
    %27 = math.log1p %26 : vector<1x256xf32>
    %28 = arith.addf %17, %27 : vector<1x256xf32>
    %29 = arith.select %20, %22, %28 : vector<1x256xi1>, vector<1x256xf32>
    %cst_8 = arith.constant 1.000000e-03 : f32
    %30 = vector.broadcast %cst_8 : f32 to vector<1x256xf32>
    %31 = arith.addf %29, %30 : vector<1x256xf32>
    %c0_9 = arith.constant 0 : index
    %c0_10 = arith.constant 0 : index
    %32 = vector.load %arg4[%c0_9, %c0_10] : memref<8x256xf32, #tpu.memory_space<vmem>>, vector<8x256xf32>
    %33 = vector.broadcast %31 : vector<1x256xf32> to vector<8x256xf32>
    %34 = arith.mulf %33, %32 : vector<8x256xf32>
    %35 = vector.broadcast %12 : vector<1x256xf32> to vector<8x256xf32>
    %36 = arith.addf %35, %34 : vector<8x256xf32>
    %cst_11 = arith.constant 0.000000e+00 : f32
    %37 = vector.broadcast %cst_11 : f32 to vector<8x256xf32>
    %38 = arith.maximumf %36, %37 : vector<8x256xf32>
    %39 = vector.broadcast %cst_11 : f32 to vector<8x256xf32>
    %40 = arith.subf %36, %39 : vector<8x256xf32>
    %41 = arith.cmpf one, %40, %40 : vector<8x256xf32>
    %42 = vector.broadcast %cst_11 : f32 to vector<8x256xf32>
    %43 = arith.addf %36, %42 : vector<8x256xf32>
    %44 = math.absf %40 : vector<8x256xf32>
    %cst_12 = arith.constant 0.000000e+00 : f32
    %45 = vector.broadcast %cst_12 : f32 to vector<8x256xf32>
    %46 = arith.subf %45, %44 : vector<8x256xf32>
    %47 = math.exp %46 : vector<8x256xf32>
    %48 = math.log1p %47 : vector<8x256xf32>
    %49 = arith.addf %38, %48 : vector<8x256xf32>
    %50 = arith.select %41, %43, %49 : vector<8x256xi1>, vector<8x256xf32>
    %51 = arith.mulf %31, %31 : vector<1x256xf32>
    %52 = arith.mulf %12, %12 : vector<1x256xf32>
    %53 = arith.addf %51, %52 : vector<1x256xf32>
    %cst_13 = arith.constant 1.000000e+00 : f32
    %54 = vector.broadcast %cst_13 : f32 to vector<1x256xf32>
    %55 = arith.subf %53, %54 : vector<1x256xf32>
    %cst_14 = arith.constant 5.000000e-01 : f32
    %56 = vector.broadcast %cst_14 : f32 to vector<1x256xf32>
    %57 = arith.mulf %56, %55 : vector<1x256xf32>
    %58 = math.log %31 : vector<1x256xf32>
    %59 = arith.subf %57, %58 : vector<1x256xf32>
    %c0_15 = arith.constant 0 : index
    %c0_16 = arith.constant 0 : index
    %60 = vector.load %arg5[%c0_15, %c0_16] : memref<4x256xf32, #tpu.memory_space<vmem>>, vector<4x256xf32>
    %61 = vector.extract_strided_slice %60 {offsets = [0, 0], sizes = [1, 256], strides = [1, 1]} : vector<4x256xf32> to vector<1x256xf32>
    %62 = arith.fptosi %61 : vector<1x256xf32> to vector<1x256xi32>
    %63 = vector.extract_strided_slice %60 {offsets = [1, 0], sizes = [1, 256], strides = [1, 1]} : vector<4x256xf32> to vector<1x256xf32>
    %64 = vector.broadcast %2 : f32 to vector<1x256xf32>
    %65 = arith.mulf %63, %64 : vector<1x256xf32>
    %66 = vector.extract_strided_slice %60 {offsets = [2, 0], sizes = [1, 256], strides = [1, 1]} : vector<4x256xf32> to vector<1x256xf32>
    %67 = vector.broadcast %2 : f32 to vector<1x256xf32>
    %68 = arith.mulf %66, %67 : vector<1x256xf32>
    %69 = vector.extract_strided_slice %60 {offsets = [3, 0], sizes = [1, 256], strides = [1, 1]} : vector<4x256xf32> to vector<1x256xf32>
    %70 = arith.fptosi %69 : vector<1x256xf32> to vector<1x256xi32>
    %c1_i32 = arith.constant 1 : i32
    %71 = arith.muli %arg0, %c1_i32 : i32
    %72 = arith.addi %71, %arg1 : i32
    %73 = tpu.iota {dimensions = array<i32: 1>} : vector<1x256xi32>
    %c256_i32 = arith.constant 256 : i32
    %74 = arith.muli %72, %c256_i32 : i32
    %75 = vector.broadcast %74 : i32 to vector<1x256xi32>
    %76 = arith.addi %73, %75 : vector<1x256xi32>
    %77 = vector.broadcast %3 : i32 to vector<1x256xi32>
    %78 = arith.cmpi slt, %76, %77 : vector<1x256xi32>
    %79 = tpu.iota {dimensions = array<i32: 0>} : vector<64x256xi32>
    %80 = vector.broadcast %62 : vector<1x256xi32> to vector<64x256xi32>
    %81 = arith.cmpi eq, %79, %80 : vector<64x256xi32>
    %82 = arith.extui %81 : vector<64x256xi1> to vector<64x256xi32>
    %83 = arith.sitofp %82 : vector<64x256xi32> to vector<64x256xf32>
    %84 = arith.truncf %83 : vector<64x256xf32> to vector<64x256xbf16>
    %c0_17 = arith.constant 0 : index
    %c0_18 = arith.constant 0 : index
    %85 = vector.load %arg6[%c0_17, %c0_18] : memref<8x64xf32, #tpu.memory_space<vmem>>, vector<8x64xf32>
    %86 = arith.truncf %85 : vector<8x64xf32> to vector<8x64xbf16>
    %cst_19 = arith.constant dense<0.000000e+00> : vector<8x256xf32>
    %87 = tpu.matmul %86, %84, %cst_19 {dimension_numbers = #tpu.dot_dimension_numbers<[1], [0], [0], [1], [0, 0, 1, 1], [], []>} : vector<8x64xbf16>, vector<64x256xbf16>, vector<8x256xf32> -> vector<8x256xf32>
    %88 = arith.mulf %87, %87 : vector<8x256xf32>
    %89 = arith.mulf %88, %50 : vector<8x256xf32>
    %cst_20 = arith.constant 1.000000e+00 : f32
    %90 = vector.broadcast %cst_20 : f32 to vector<1x256xf32>
    %91 = arith.select %78, %68, %90 : vector<1x256xi1>, vector<1x256xf32>
    %92 = tpu.reciprocal %91 : vector<1x256xf32> -> vector<1x256xf32>
    %93 = vector.broadcast %65 : vector<1x256xf32> to vector<8x256xf32>
    %94 = arith.subf %93, %89 : vector<8x256xf32>
    %95 = vector.broadcast %92 : vector<1x256xf32> to vector<8x256xf32>
    %96 = arith.mulf %94, %95 : vector<8x256xf32>
    %cst_21 = arith.constant -5.000000e-01 : f32
    %97 = vector.broadcast %cst_21 : f32 to vector<8x256xf32>
    %98 = arith.mulf %97, %96 : vector<8x256xf32>
    %99 = arith.mulf %98, %96 : vector<8x256xf32>
    %100 = math.log %91 : vector<1x256xf32>
    %101 = vector.broadcast %100 : vector<1x256xf32> to vector<8x256xf32>
    %102 = arith.subf %99, %101 : vector<8x256xf32>
    %cst_22 = arith.constant 0.918938517 : f32
    %103 = vector.broadcast %cst_22 : f32 to vector<8x256xf32>
    %104 = arith.subf %102, %103 : vector<8x256xf32>
    %cst_23 = arith.constant 0.000000e+00 : f32
    %105 = vector.shape_cast %78 : vector<1x256xi1> to vector<1x256xi1>
    %106 = vector.broadcast %105 : vector<1x256xi1> to vector<8x256xi1>
    %107 = vector.broadcast %cst_23 : f32 to vector<8x256xf32>
    %108 = arith.select %106, %104, %107 : vector<8x256xi1>, vector<8x256xf32>
    %109 = tpu.iota {dimensions = array<i32: 0>} : vector<8x256xi32>
    %110 = vector.broadcast %70 : vector<1x256xi32> to vector<8x256xi32>
    %111 = arith.cmpi eq, %109, %110 : vector<8x256xi32>
    %112 = vector.broadcast %78 : vector<1x256xi1> to vector<8x256xi1>
    %113 = arith.andi %111, %112 : vector<8x256xi1>
    %114 = arith.extui %113 : vector<8x256xi1> to vector<8x256xi32>
    %115 = arith.sitofp %114 : vector<8x256xi32> to vector<8x256xf32>
    %116 = arith.truncf %115 : vector<8x256xf32> to vector<8x256xbf16>
    %c0_24 = arith.constant 0 : index
    %c0_25 = arith.constant 0 : index
    %c0_26 = arith.constant 0 : index
    %117 = vector.load %arg10[%c0_24, %c0_25, %c0_26] : memref<1x8x8xf32, #tpu.memory_space<vmem>>, vector<1x8x8xf32>
    %118 = vector.shape_cast %117 : vector<1x8x8xf32> to vector<8x8xf32>
    %119 = arith.truncf %108 : vector<8x256xf32> to vector<8x256xbf16>
    %cst_27 = arith.constant dense<0.000000e+00> : vector<8x8xf32>
    %120 = tpu.matmul %116, %119, %cst_27 {dimension_numbers = #tpu.dot_dimension_numbers<[1], [1], [0], [0], [0, 0, 1, 0], [], []>} : vector<8x256xbf16>, vector<8x256xbf16>, vector<8x8xf32> -> vector<8x8xf32>
    %121 = arith.addf %118, %120 : vector<8x8xf32>
    %c0_28 = arith.constant 0 : index
    %c0_29 = arith.constant 0 : index
    %c0_30 = arith.constant 0 : index
    %122 = vector.load %arg10[%c0_28, %c0_29, %c0_30] : memref<1x8x8xf32, #tpu.memory_space<vmem>>, vector<1x8x8xf32>
    %123 = vector.shape_cast %122 : vector<1x8x8xf32> to vector<8x8xf32>
    %124 = vector.shape_cast %121 : vector<8x8xf32> to vector<1x8x8xf32>
    tpu.vector_store %arg10[%c0_28, %c0_29, %c0_30], %124 {strides = array<i32>} : memref<1x8x8xf32, #tpu.memory_space<vmem>>, vector<1x8x8xf32>,
    %cst_31 = arith.constant dense<0.000000e+00> : vector<256xf32>
    %125 = vector.multi_reduction <add>, %89, %cst_31 [0] : vector<8x256xf32> to vector<256xf32>
    %126 = vector.shape_cast %125 : vector<256xf32> to vector<1x256xf32>
    %cst_32 = arith.constant 8.000000e+00 : f32
    %127 = vector.broadcast %cst_32 : f32 to vector<1x256xf32>
    %128 = arith.divf %126, %127 : vector<1x256xf32>
    %c0_33 = arith.constant 0 : index
    %c0_34 = arith.constant 0 : index
    %129 = vector.load %arg9[%c0_33, %c0_34] : memref<2x256xf32, #tpu.memory_space<vmem>>, vector<1x256xf32>
    tpu.vector_store %arg9[%c0_33, %c0_34], %128 {strides = array<i32>} : memref<2x256xf32, #tpu.memory_space<vmem>>, vector<1x256xf32>,
    %c1_35 = arith.constant 1 : index
    %c0_36 = arith.constant 0 : index
    %130 = vector.load %arg9[%c1_35, %c0_36] : memref<2x256xf32, #tpu.memory_space<vmem>>, vector<1x256xf32>
    tpu.vector_store %arg9[%c1_35, %c0_36], %59 {strides = array<i32>} : memref<2x256xf32, #tpu.memory_space<vmem>>, vector<1x256xf32>,
    return
  }
  func.func @transform_0(%arg0: i32, %arg1: i32) -> (i32, i32) {
    %c1_i32 = arith.constant 1 : i32
    %0 = arith.muli %arg0, %c1_i32 : i32
    %1 = arith.addi %0, %arg1 : i32
    %c0_i32 = arith.constant 0 : i32
    %c0_i32_0 = arith.constant 0 : i32
    return %c0_i32, %1 : i32, i32
  }
  func.func @transform_1(%arg0: i32, %arg1: i32) -> (i32, i32) {
    %c0_i32 = arith.constant 0 : i32
    %c0_i32_0 = arith.constant 0 : i32
    %c0_i32_1 = arith.constant 0 : i32
    return %c0_i32, %c0_i32_0 : i32, i32
  }
  func.func @transform_2(%arg0: i32, %arg1: i32) -> (i32, i32) {
    %c1_i32 = arith.constant 1 : i32
    %0 = arith.muli %arg0, %c1_i32 : i32
    %1 = arith.addi %0, %arg1 : i32
    %c0_i32 = arith.constant 0 : i32
    %c0_i32_0 = arith.constant 0 : i32
    return %c0_i32, %1 : i32, i32
  }
  func.func @transform_3(%arg0: i32, %arg1: i32) -> (i32, i32) {
    %c1_i32 = arith.constant 1 : i32
    %0 = arith.muli %arg0, %c1_i32 : i32
    %1 = arith.addi %0, %arg1 : i32
    %c0_i32 = arith.constant 0 : i32
    %c0_i32_0 = arith.constant 0 : i32
    return %c0_i32, %1 : i32, i32
  }
  func.func @transform_4(%arg0: i32, %arg1: i32) -> (i32, i32) {
    %c0_i32 = arith.constant 0 : i32
    %c0_i32_0 = arith.constant 0 : i32
    %c0_i32_1 = arith.constant 0 : i32
    return %c0_i32, %c0_i32_0 : i32, i32
  }
  func.func @transform_5(%arg0: i32, %arg1: i32) -> i32 {
    %c0_i32 = arith.constant 0 : i32
    %c0_i32_0 = arith.constant 0 : i32
    return %c0_i32 : i32
  }
  func.func @transform_6(%arg0: i32, %arg1: i32) -> i32 {
    %c0_i32 = arith.constant 0 : i32
    %c0_i32_0 = arith.constant 0 : i32
    return %c0_i32 : i32
  }
  func.func @transform_7(%arg0: i32, %arg1: i32) -> (i32, i32) {
    %c1_i32 = arith.constant 1 : i32
    %0 = arith.muli %arg0, %c1_i32 : i32
    %1 = arith.addi %0, %arg1 : i32
    %c0_i32 = arith.constant 0 : i32
    %c0_i32_0 = arith.constant 0 : i32
    return %c0_i32, %1 : i32, i32
  }
  func.func @transform_8(%arg0: i32, %arg1: i32) -> (i32, i32, i32) {
    %c0_i32 = arith.constant 0 : i32
    %c0_i32_0 = arith.constant 0 : i32
    %c0_i32_1 = arith.constant 0 : i32
    return %arg0, %c0_i32, %c0_i32_0 : i32, i32, i32
  }
}

</mosaic_0001>

<llo_original>
// kernel: merging_forward.1
$region0: #{merging_forward.1}
  #allocation0 [shape = 'u32[]', space=smem, size = 0x4, offset = 0x4, fixed_abs, tag = 'smem constant byte address 0x4 - core index']
  #allocation1 [shape = 'u32[144,128]{1,0:T(1,128)}', space=vmem, size = 0x12000, scoped, tag = 'internal scratch']
  #allocation2 [shape = 's32[1]{0:T(128)S(6)}', space=smem, size = 0x200, scoped, tag = 'scoped memory for merging_forward.1']
  %s0 = inlined_call_operand.vmem [shape: f32[16,256], index: 0, kind: input, shape index: {}]
  %s1 = inlined_call_operand.vmem [shape: f32[8,16], index: 1, kind: input, shape index: {}]
  %s2 = inlined_call_operand.vmem [shape: f32[8,256], index: 2, kind: input, shape index: {}]
  %s3 = inlined_call_operand.vmem [shape: f32[4,256], index: 3, kind: input, shape index: {}]
  %s4 = inlined_call_operand.vmem [shape: f32[8,64], index: 4, kind: input, shape index: {}]
  %s5 = inlined_call_operand.vmem [shape: f32[3], index: 5, kind: input, shape index: {}]
  %s6 = inlined_call_operand.<no memory space> [shape: s32[1], index: 6, kind: input, shape index: {}]
  %s7 = inlined_call_operand.vmem [shape: f32[2,256], index: 7, kind: output, shape index: {0}]
  %s8 = inlined_call_operand.vmem [shape: f32[1,8,8], index: 8, kind: output, shape index: {1}]
  %9 = xla_tuple %s7, %s8
  %s10 = sld [smem:[#allocation0]]
  $region54: #{merging_forward.1} parent=0
    _
  %s12 = ssub.s32 1, %s10
  %s13 = scalar_select 0, %s12, %s10
  %14 = sst [smem:[#allocation2]] %s6
  $region1: #{merging_forward.1} parent=0
    #allocation3 [shape = 'u8[512]{0}', space=smem, size = 0x200, scoped, tag = 'input window, operand 5, single buffered']
    #allocation4 [shape = 's32[1]{0}', space=sflag, size = 0x4, scoped, tag = 'scoped memory for merging_forward.1']
    %15 = vsyncpa [#allocation4], 0
    // Predicated region
    $region2: #{merging_forward.1} parent=1 // pred_check
      _
    $region3: #{merging_forward.1} parent=1 // pred_check_branch
      %17 = sbr.rel (0) target = $region5
    $region4: #{merging_forward.1} parent=1 // pred_region
      %s18 = sadd.s32 0, 0
      %s19 = smul.u32 2, %s18
      %p20 = scmp.lt.s32.totalorder %s19, 1
      %s21 = scalar_select %p20, %s19, 1
      %s22 = smul.addr %s21, 8
      %s23 = scalar_lea.vmem %s0, %s22
      %s24 = sadd.s32 0, 0
      %s25 = smul.u32 2, %s24
    $region5: #{merging_forward.1} parent=1 // pred_fallthru
      _
    // Predicated region
    $region6: #{merging_forward.1} parent=1 // pred_check
      _
    $region7: #{merging_forward.1} parent=1 // pred_check_branch
      %27 = sbr.rel (0) target = $region9
    $region8: #{merging_forward.1} parent=1 // pred_region
      _
    $region9: #{merging_forward.1} parent=1 // pred_fallthru
      _
    // Predicated region
    $region10: #{merging_forward.1} parent=1 // pred_check
      _
    $region11: #{merging_forward.1} parent=1 // pred_check_branch
      %29 = sbr.rel (0) target = $region13
    $region12: #{merging_forward.1} parent=1 // pred_region
      %s30 = sadd.s32 0, 0
      %s31 = smul.u32 2, %s30
      %p32 = scmp.lt.s32.totalorder %s31, 1
      %s33 = scalar_select %p32, %s31, 1
      %s34 = smul.addr %s33, 8
      %s35 = scalar_lea.vmem %s2, %s34
      %s36 = sadd.s32 0, 0
      %s37 = smul.u32 2, %s36
    $region13: #{merging_forward.1} parent=1 // pred_fallthru
      _
    // Predicated region
    $region14: #{merging_forward.1} parent=1 // pred_check
      _
    $region15: #{merging_forward.1} parent=1 // pred_check_branch
      %39 = sbr.rel (0) target = $region17
    $region16: #{merging_forward.1} parent=1 // pred_region
      %s40 = sadd.s32 0, 0
      %s41 = smul.u32 2, %s40
      %p42 = scmp.lt.s32.totalorder %s41, 1
      %s43 = scalar_select %p42, %s41, 1
      %s44 = smul.addr %s43, 4
      %s45 = scalar_lea.vmem %s3, %s44
      %s46 = sadd.s32 0, 0
      %s47 = smul.u32 2, %s46
    $region17: #{merging_forward.1} parent=1 // pred_fallthru
      _
    // Predicated region
    $region18: #{merging_forward.1} parent=1 // pred_check
      _
    $region19: #{merging_forward.1} parent=1 // pred_check_branch
      %49 = sbr.rel (0) target = $region21
    $region20: #{merging_forward.1} parent=1 // pred_region
      _
    $region21: #{merging_forward.1} parent=1 // pred_fallthru
      _
    // Predicated region
    $region22: #{merging_forward.1} parent=1 // pred_check
      _
    $region23: #{merging_forward.1} parent=1 // pred_check_branch
      %51 = sbr.rel (0) target = $region25
    $region24: #{merging_forward.1} parent=1 // pred_region
      %s53 = ssub.s32 16, 16
      %54 = vsyncadd [#allocation4], %s53
      %s56 = sshll.u32 %s5, 4
      %s57 = int_to_ptr.vmem [resolvable:$true] %s56
      %59 = dma.vmem_to_smem %s57, 16, [#allocation3], [#allocation4]
    $region25: #{merging_forward.1} parent=1 // pred_fallthru
      _
    // Predicated region
    $region26: #{merging_forward.1} parent=1 // pred_check
      _
    $region27: #{merging_forward.1} parent=1 // pred_check_branch
      %61 = sbr.rel (0) target = $region29
    $region28: #{merging_forward.1} parent=1 // pred_region
      _
    $region29: #{merging_forward.1} parent=1 // pred_fallthru
      _
    // Predicated region
    $region30: #{merging_forward.1} parent=1 // pred_check
      _
    $region31: #{merging_forward.1} parent=1 // pred_check_branch
      %63 = sbr.rel (0) target = $region33
    $region32: #{merging_forward.1} parent=1 // pred_region
      %64 = dma.done [#allocation4], 16
    $region33: #{merging_forward.1} parent=1 // pred_fallthru
      _
    %65 = sfence
    %s66 = sadd.s32 0, 0
    %s67 = smul.u32 2, %s66
    %p68 = scmp.lt.s32.totalorder %s67, 1
    %s69 = scalar_select %p68, %s67, 1
    %s70 = smul.addr %s69, 8
    %s71 = scalar_lea.vmem %s0, %s70
    %s72 = sadd.s32 0, 0
    %s73 = smul.u32 2, %s72
    %p74 = scmp.lt.s32.totalorder %s73, 1
    %s75 = scalar_select %p74, %s73, 1
    %s76 = smul.addr %s75, 8
    %s77 = scalar_lea.vmem %s2, %s76
    %s78 = sadd.s32 0, 0
    %s79 = smul.u32 2, %s78
    %p80 = scmp.lt.s32.totalorder %s79, 1
    %s81 = scalar_select %p80, %s79, 1
    %s82 = smul.addr %s81, 4
    %s83 = scalar_lea.vmem %s3, %s82
    %s84 = sadd.s32 0, 0
    %s85 = smul.u32 2, %s84
    %p86 = scmp.lt.s32.totalorder %s85, 1
    %s87 = scalar_select %p86, %s85, 1
    %s88 = smul.addr %s87, 2
    %s89 = scalar_lea.vmem %s7, %s88
    %s90 = sadd.s32 0, 0
    %s91 = smul.u32 2, %s90
    %p92 = scmp.lt.s32.totalorder %s91, 1
    %s93 = scalar_select %p92, %s91, 1
    %s94 = smul.addr %s93, 8
    %s95 = scalar_lea.vmem %s0, %s94
    %s96 = sadd.s32 0, 0
    %s97 = smul.u32 2, %s96
    %s98 = sadd.s32 0, 0
    %s99 = smul.u32 2, %s98
    %p100 = scmp.lt.s32.totalorder %s99, 1
    %s101 = scalar_select %p100, %s99, 1
    %s102 = smul.addr %s101, 8
    %s103 = scalar_lea.vmem %s2, %s102
    %s104 = sadd.s32 0, 0
    %s105 = smul.u32 2, %s104
    %s106 = sadd.s32 0, 0
    %s107 = smul.u32 2, %s106
    %p108 = scmp.lt.s32.totalorder %s107, 1
    %s109 = scalar_select %p108, %s107, 1
    %s110 = smul.addr %s109, 4
    %s111 = scalar_lea.vmem %s3, %s110
    %s112 = sadd.s32 0, 0
    %s113 = smul.u32 2, %s112
    %s114 = sadd.s32 0, 0
    %s115 = smul.u32 2, %s114
    %p116 = scmp.lt.s32.totalorder %s115, 1
    %s117 = scalar_select %p116, %s115, 1
    %s118 = smul.addr %s117, 2
    %s119 = scalar_lea.vmem %s7, %s118
    %s120 = sadd.s32 0, 0
    %s121 = smul.u32 2, %s120
    %s123 = sld [smem:[#allocation3]]
    %s124 = sld [smem:[#allocation3 + $0x1]]
    %s125 = sld [smem:[#allocation3 + $0x2]]
    %s126 = sld [smem:[#allocation2]]
    %p127 = scmp.eq.s32.totalorder 0, 0
    // Predicated region
    $region34: #{merging_forward.1} parent=1 // pred_check
      %p128 = pneg %p127
    $region35: #{merging_forward.1} parent=1 // pred_check_branch
      %130 = sbr.rel (%p128) target = $region37
    $region36: #{merging_forward.1} parent=1 // pred_region
      %vm131 = vcmask 64512
      %132 = vst.msk [vmem:[%s8] sm:$0xff] %vm131, 0.0
    $region37: #{merging_forward.1} parent=1 // pred_fallthru
      _
    %v133 = vld [vmem:[%s1] sm:$0xff]
    %v134 = vld [vmem:[%s95] sm:$0xff]
    %v135 = vld [vmem:[%s95 + $0x8] sm:$0xff]
    %v136 = vld [vmem:[%s95 + $0x10] sm:$0xff]
    %v137 = vld [vmem:[%s95 + $0x18] sm:$0xff]
    %vm138 = vcmask 130048
    %v140 = vsel %vm138, %v133, 0
    %142 = vmatprep.subr.mxu0 %v135
    %143 = vmatpush1.msra.mxu0 %v134
    %144 = vmatprep.subr.mxu0 %v137
    %145 = vmatpush1.msra.mxu0 %v136
    %146 = vmatprep.subr.mxu0 0.0
    %147 = vmatpush1.msra.mxu0 0.0
    %148 = vmatprep.subr.mxu0 0.0
    %149 = vmatpush1.msra.mxu0 0.0
    %150 = vmatprep.subr.mxu0 0.0
    %151 = vmatpush1.msra.mxu0 0.0
    %152 = vmatprep.subr.mxu0 0.0
    %153 = vmatpush1.msra.mxu0 0.0
    %154 = vmatprep.subr.mxu0 0.0
    %155 = vmatpush1.msra.mxu0 0.0
    %156 = vmatprep.subr.mxu0 0.0
    %157 = vmatpush1.msra.mxu0 0.0
    %158 = vmatprep.subr.mxu0 0.0
    %159 = vmatpush1.msra.mxu0 0.0
    %160 = vmatprep.subr.mxu0 0.0
    %161 = vmatpush1.msra.mxu0 0.0
    %162 = vmatprep.subr.mxu0 0.0
    %163 = vmatpush1.msra.mxu0 0.0
    %164 = vmatprep.subr.mxu0 0.0
    %165 = vmatpush1.msra.mxu0 0.0
    %166 = vmatprep.subr.mxu0 0.0
    %167 = vmatpush1.msra.mxu0 0.0
    %168 = vmatprep.subr.mxu0 0.0
    %169 = vmatpush1.msra.mxu0 0.0
    %170 = vmatprep.subr.mxu0 0.0
    %171 = vmatpush1.msra.mxu0 0.0
    %172 = vmatprep.subr.mxu0 0.0
    %173 = vmatpush1.msra.mxu0 0.0
    %174 = vmatprep.subr.mxu0 0.0
    %175 = vmatpush1.msra.mxu0 0.0
    %176 = vmatprep.subr.mxu0 0.0
    %177 = vmatpush1.msra.mxu0 0.0
    %178 = vmatprep.subr.mxu0 0.0
    %179 = vmatpush1.msra.mxu0 0.0
    %180 = vmatprep.subr.mxu0 0.0
    %181 = vmatpush1.msra.mxu0 0.0
    %182 = vmatprep.subr.mxu0 0.0
    %183 = vmatpush1.msra.mxu0 0.0
    %184 = vmatprep.subr.mxu0 0.0
    %185 = vmatpush1.msra.mxu0 0.0
    %186 = vmatprep.subr.mxu0 0.0
    %187 = vmatpush1.msra.mxu0 0.0
    %188 = vmatprep.subr.mxu0 0.0
    %189 = vmatpush1.msra.mxu0 0.0
    %190 = vmatprep.subr.mxu0 0.0
    %191 = vmatpush1.msra.mxu0 0.0
    %192 = vmatprep.subr.mxu0 0.0
    %193 = vmatpush1.msra.mxu0 0.0
    %194 = vmatprep.subr.mxu0 0.0
    %195 = vmatpush1.msra.mxu0 0.0
    %196 = vmatprep.subr.mxu0 0.0
    %197 = vmatpush1.msra.mxu0 0.0
    %198 = vmatprep.subr.mxu0 0.0
    %199 = vmatpush1.msra.mxu0 0.0
    %200 = vmatprep.subr.mxu0 0.0
    %201 = vmatpush1.msra.mxu0 0.0
    %202 = vmatprep.subr.mxu0 0.0
    %203 = vmatpush1.msra.mxu0 0.0
    %204 = vmatprep.subr.mxu0 0.0
    %205 = vmatpush1.msra.mxu0 0.0
    %206 = vmatprep.mubr.f32.mxu0 0.0
    %207 = vmatmul.mubr.f32.gmra.mrb[0].mxu0 %v140
    %v208 = vpop.f32.mrb[0].mxu0
    %v209 = vadd.f32 0.0, %v208
    %v210 = vpop.f32.mrb[0].mxu0
    %v211 = vadd.f32 0.0, %v210
    %212 = vdwg.mxu0
    %v213 = vstv %s123
    %v214 = vadd.f32 %v209, %v213
    %v215 = vadd.f32 %v211, %v213
    %v216 = vstv %s124
    %v217 = vadd.f32 %v209, %v216
    %v218 = vadd.f32 %v211, %v216
    %v219 = vmax.f32 %v217, 0.0
    %v220 = vmax.f32 %v218, 0.0
    %vm221 = vcmp.ne.f32.partialorder %v217, %v217
    %vm222 = vcmp.ne.f32.partialorder %v218, %v218
    %v223 = vadd.f32 %v217, 0.0
    %v224 = vadd.f32 %v218, 0.0
    %v225 = vand.u32 2147483647, %v217
    %v226 = vand.u32 2147483647, %v218
    %v227 = vsub.f32 0.0, %v225
    %v228 = vsub.f32 0.0, %v226
    %v229 = vmul.f32 %v227, 1.442695
    %v230 = vpow.pop %v229
    %v231 = vmul.f32 %v228, 1.442695
    %v232 = vpow.pop %v231
    %v233 = vadd.f32 %v230, 1.0
    %v234 = vlog2.pop %v233
    %v235 = vmul.f32 %v234, 0.6931472
    %v236 = vmul.f32 -0.5, %v230
    %v237 = vadd.f32 %v236, 1.0
    %v238 = vmul.f32 %v237, %v230
    %v239 = vand.u32 2147483647, %v230
    %vm240 = vcmp.lt.f32.partialorder %v239, 0.0004427343
    %v241 = vsel %vm240, %v238, %v235
    %v242 = vadd.f32 %v232, 1.0
    %v243 = vlog2.pop %v242
    %v244 = vmul.f32 %v243, 0.6931472
    %v245 = vmul.f32 -0.5, %v232
    %v246 = vadd.f32 %v245, 1.0
    %v247 = vmul.f32 %v246, %v232
    %v248 = vand.u32 2147483647, %v232
    %vm249 = vcmp.lt.f32.partialorder %v248, 0.0004427343
    %v250 = vsel %vm249, %v247, %v244
    %v251 = vadd.f32 %v219, %v241
    %v252 = vadd.f32 %v220, %v250
    %v253 = vsel %vm221, %v223, %v251
    %v254 = vsel %vm222, %v224, %v252
    %v255 = vadd.f32 %v253, 0.001
    %v256 = vadd.f32 %v254, 0.001
    %v257 = vld [vmem:[%s103] sm:$0xff]
    %v258 = vld [vmem:[%s103 + $0x8] sm:$0xff]
    %v259 = vlaneseq
    %v260 = vshrl.u32 %v259, 7
    %v261 = vsub.s32 1, %v260
    %v262 = vrot.slane %v255, %v261
    %v263 = vlaneseq
    %v264 = vshrl.u32 %v263, 7
    %v265 = vsub.s32 1, %v264
    %v266 = vrot.slane %v256, %v265
    %v267 = vmul.f32 %v262, %v257
    %v268 = vmul.f32 %v266, %v258
    %v269 = vlaneseq
    %v270 = vshrl.u32 %v269, 7
    %v271 = vsub.s32 0, %v270
    %v272 = vrot.slane %v214, %v271
    %v273 = vlaneseq
    %v274 = vshrl.u32 %v273, 7
    %v275 = vsub.s32 0, %v274
    %v276 = vrot.slane %v215, %v275
    %v277 = vadd.f32 %v272, %v267
    %v278 = vadd.f32 %v276, %v268
    %v279 = vmax.f32 %v277, 0.0
    %v280 = vmax.f32 %v278, 0.0
    %vm281 = vcmp.ne.f32.partialorder %v277, %v277
    %vm282 = vcmp.ne.f32.partialorder %v278, %v278
    %v283 = vadd.f32 %v277, 0.0
    %v284 = vadd.f32 %v278, 0.0
    %v285 = vand.u32 2147483647, %v277
    %v286 = vand.u32 2147483647, %v278
    %v287 = vsub.f32 0.0, %v285
    %v288 = vsub.f32 0.0, %v286
    %v289 = vmul.f32 %v287, 1.442695
    %v290 = vpow.pop %v289
    %v291 = vmul.f32 %v288, 1.442695
    %v292 = vpow.pop %v291
    %v293 = vadd.f32 %v290, 1.0
    %v294 = vlog2.pop %v293
    %v295 = vmul.f32 %v294, 0.6931472
    %v296 = vmul.f32 -0.5, %v290
    %v297 = vadd.f32 %v296, 1.0
    %v298 = vmul.f32 %v297, %v290
    %v299 = vand.u32 2147483647, %v290
    %vm300 = vcmp.lt.f32.partialorder %v299, 0.0004427343
    %v301 = vsel %vm300, %v298, %v295
    %v302 = vadd.f32 %v292, 1.0
    %v303 = vlog2.pop %v302
    %v304 = vmul.f32 %v303, 0.6931472
    %v305 = vmul.f32 -0.5, %v292
    %v306 = vadd.f32 %v305, 1.0
    %v307 = vmul.f32 %v306, %v292
    %v308 = vand.u32 2147483647, %v292
    %vm309 = vcmp.lt.f32.partialorder %v308, 0.0004427343
    %v310 = vsel %vm309, %v307, %v304
    %v311 = vadd.f32 %v279, %v301
    %v312 = vadd.f32 %v280, %v310
    %v313 = vsel %vm281, %v283, %v311
    %v314 = vsel %vm282, %v284, %v312
    %v315 = vmul.f32 %v255, %v255
    %v316 = vmul.f32 %v256, %v256
    %v317 = vmul.f32 %v214, %v214
    %v318 = vmul.f32 %v215, %v215
    %v321 = vrot.slane %v317, 7
    %v322 = vrot.slane %v318, 7
    %v325 = vadd.f32 %v315, %v321
    %v326 = vadd.f32 %v316, %v322
    %v327 = vsub.f32 %v325, 1.0
    %v328 = vsub.f32 %v326, 1.0
    %v329 = vmul.f32 %v327, 0.5
    %v330 = vmul.f32 %v328, 0.5
    %v331 = vlog2.pop %v255
    %v332 = vmul.f32 %v331, 0.6931472
    %v333 = vlog2.pop %v256
    %v334 = vmul.f32 %v333, 0.6931472
    %v335 = vsub.f32 %v329, %v332
    %v336 = vsub.f32 %v330, %v334
    %v337 = vld [vmem:[%s111] sm:$0xff]
    %v338 = vcvt.f32.s32.to.zero.pseudo %v337
    %v339 = vstv %s125
    %v340 = vmul.f32 %v337, %v339
    %s341 = sadd.s32 0, 0
    %v342 = vlaneseq
    %v343 = vand.u32 %v342, 127
    %v344 = vadd.s32 %v343, 128
    %s345 = smul.u32 %s341, 256
    %v346 = vstv %s345
    %v347 = vadd.s32 %v343, %v346
    %v348 = vadd.s32 %v344, %v346
    %v349 = vstv %s126
    %vm350 = vcmp.lt.s32.totalorder %v347, %v349
    %vm351 = vcmp.lt.s32.totalorder %v348, %v349
    %v352 = vlaneseq
    %v353 = vshrl.u32 %v352, 7
    %v354 = vadd.s32 %v353, 8
    %v355 = vadd.s32 %v353, 16
    %v356 = vadd.s32 %v353, 24
    %v357 = vadd.s32 %v353, 32
    %v358 = vadd.s32 %v353, 40
    %v359 = vadd.s32 %v353, 48
    %v360 = vadd.s32 %v353, 56
    %v361 = vlaneseq
    %v362 = vshrl.u32 %v361, 7
    %v363 = vsub.s32 0, %v362
    %v364 = vrot.slane %v338, %v363
    %v365 = vlaneseq
    %v366 = vshrl.u32 %v365, 7
    %v367 = vsub.s32 4, %v366
    %v368 = vrot.slane %v338, %v367
    %v369 = vlaneseq
    %v370 = vshrl.u32 %v369, 7
    %v371 = vsub.s32 0, %v370
    %v372 = vrot.slane %v364, %v371
    %v373 = vlaneseq
    %v374 = vshrl.u32 %v373, 7
    %v375 = vsub.s32 0, %v374
    %v376 = vrot.slane %v368, %v375
    %vm377 = vcmp.eq.s32.totalorder %v353, %v372
    %vm378 = vcmp.eq.s32.totalorder %v353, %v376
    %vm379 = vcmp.eq.s32.totalorder %v354, %v372
    %vm380 = vcmp.eq.s32.totalorder %v354, %v376
    %vm381 = vcmp.eq.s32.totalorder %v355, %v372
    %vm382 = vcmp.eq.s32.totalorder %v355, %v376
    %vm383 = vcmp.eq.s32.totalorder %v356, %v372
    %vm384 = vcmp.eq.s32.totalorder %v356, %v376
    %vm385 = vcmp.eq.s32.totalorder %v357, %v372
    %vm386 = vcmp.eq.s32.totalorder %v357, %v376
    %vm387 = vcmp.eq.s32.totalorder %v358, %v372
    %vm388 = vcmp.eq.s32.totalorder %v358, %v376
    %vm389 = vcmp.eq.s32.totalorder %v359, %v372
    %vm390 = vcmp.eq.s32.totalorder %v359, %v376
    %vm391 = vcmp.eq.s32.totalorder %v360, %v372
    %vm392 = vcmp.eq.s32.totalorder %v360, %v376
    %v393 = vsel %vm377, 1, 0
    %v394 = vsel %vm378, 1, 0
    %v395 = vsel %vm379, 1, 0
    %v396 = vsel %vm380, 1, 0
    %v397 = vsel %vm381, 1, 0
    %v398 = vsel %vm382, 1, 0
    %v399 = vsel %vm383, 1, 0
    %v400 = vsel %vm384, 1, 0
    %v401 = vsel %vm385, 1, 0
    %v402 = vsel %vm386, 1, 0
    %v403 = vsel %vm387, 1, 0
    %v404 = vsel %vm388, 1, 0
    %v405 = vsel %vm389, 1, 0
    %v406 = vsel %vm390, 1, 0
    %v407 = vsel %vm391, 1, 0
    %v408 = vsel %vm392, 1, 0
    %v409 = vcvt.s32.f32 %v393
    %v410 = vcvt.s32.f32 %v394
    %v411 = vcvt.s32.f32 %v395
    %v412 = vcvt.s32.f32 %v396
    %v413 = vcvt.s32.f32 %v397
    %v414 = vcvt.s32.f32 %v398
    %v415 = vcvt.s32.f32 %v399
    %v416 = vcvt.s32.f32 %v400
    %v417 = vcvt.s32.f32 %v401
    %v418 = vcvt.s32.f32 %v402
    %v419 = vcvt.s32.f32 %v403
    %v420 = vcvt.s32.f32 %v404
    %v421 = vcvt.s32.f32 %v405
    %v422 = vcvt.s32.f32 %v406
    %v423 = vcvt.s32.f32 %v407
    %v424 = vcvt.s32.f32 %v408
    %v425 = vpack.c.bf16 %v411, %v409
    %v426 = vpack.c.bf16 %v412, %v410
    %v427 = vpack.c.bf16 %v415, %v413
    %v428 = vpack.c.bf16 %v416, %v414
    %v429 = vpack.c.bf16 %v419, %v417
    %v430 = vpack.c.bf16 %v420, %v418
    %v431 = vpack.c.bf16 %v423, %v421
    %v432 = vpack.c.bf16 %v424, %v422
    %v433 = vld [vmem:[%s4] sm:$0xff]
    %v434 = vpack.c.bf16 %v433, %v433
    %vm435 = vcmask 523264
    %v437 = vsel %vm435, %v434, 0
    %439 = vmatprep.subr.bf16.mxu0 %v426
    %440 = vmatpush1.bf16.msra.mxu0 %v425
    %441 = vmatprep.subr.bf16.mxu0 %v428
    %442 = vmatpush1.bf16.msra.mxu0 %v427
    %443 = vmatprep.subr.bf16.mxu0 %v430
    %444 = vmatpush1.bf16.msra.mxu0 %v429
    %445 = vmatprep.subr.bf16.mxu0 %v432
    %446 = vmatpush1.bf16.msra.mxu0 %v431
    %447 = vmatprep.subr.bf16.mxu0 0
    %448 = vmatpush1.bf16.msra.mxu0 0
    %449 = vmatprep.subr.bf16.mxu0 0
    %450 = vmatpush1.bf16.msra.mxu0 0
    %451 = vmatprep.subr.bf16.mxu0 0
    %452 = vmatpush1.bf16.msra.mxu0 0
    %453 = vmatprep.subr.bf16.mxu0 0
    %454 = vmatpush1.bf16.msra.mxu0 0
    %455 = vmatprep.subr.bf16.mxu0 0
    %456 = vmatpush1.bf16.msra.mxu0 0
    %457 = vmatprep.subr.bf16.mxu0 0
    %458 = vmatpush1.bf16.msra.mxu0 0
    %459 = vmatprep.subr.bf16.mxu0 0
    %460 = vmatpush1.bf16.msra.mxu0 0
    %461 = vmatprep.subr.bf16.mxu0 0
    %462 = vmatpush1.bf16.msra.mxu0 0
    %463 = vmatprep.subr.bf16.mxu0 0
    %464 = vmatpush1.bf16.msra.mxu0 0
    %465 = vmatprep.subr.bf16.mxu0 0
    %466 = vmatpush1.bf16.msra.mxu0 0
    %467 = vmatprep.subr.bf16.mxu0 0
    %468 = vmatpush1.bf16.msra.mxu0 0
    %469 = vmatprep.subr.bf16.mxu0 0
    %470 = vmatpush1.bf16.msra.mxu0 0
    %471 = vmatprep.mubr.bf16.mxu0 0
    %472 = vmatmul.mubr.bf16.gmra.mrb[0].mxu0 %v437
    %v473 = vpop.f32.mrb[0].mxu0
    %v474 = vadd.f32 0.0, %v473
    %v475 = vpop.f32.mrb[0].mxu0
    %v476 = vadd.f32 0.0, %v475
    %v477 = vpop.f32.mrb[0].mxu0
    %v478 = vpop.f32.mrb[0].mxu0
    %479 = vdwg.mxu0
    %v480 = vmul.f32 %v474, %v474
    %v481 = vmul.f32 %v476, %v476
    %v482 = vmul.f32 %v480, %v313
    %v483 = vmul.f32 %v481, %v314
    %v485 = vlaneseq
    %v486 = vshrl.u32 %v485, 7
    %v487 = vsub.s32 2, %v486
    %v488 = vrot.slane %v340, %v487
    %v489 = vlaneseq
    %v490 = vshrl.u32 %v489, 7
    %v491 = vsub.s32 6, %v490
    %v492 = vrot.slane %v340, %v491
    %v495 = vsel %vm350, %v488, 1.0
    %v496 = vsel %vm351, %v492, 1.0
    %v497 = vrcp.pop %v495
    %v498 = vrcp.pop %v496
    %v499 = vlaneseq
    %v500 = vshrl.u32 %v499, 7
    %v501 = vsub.s32 1, %v500
    %v502 = vrot.slane %v340, %v501
    %v503 = vlaneseq
    %v504 = vshrl.u32 %v503, 7
    %v505 = vsub.s32 5, %v504
    %v506 = vrot.slane %v340, %v505
    %v509 = vlaneseq
    %v510 = vshrl.u32 %v509, 7
    %v511 = vsub.s32 1, %v510
    %v512 = vrot.slane %v502, %v511
    %v513 = vlaneseq
    %v514 = vshrl.u32 %v513, 7
    %v515 = vsub.s32 1, %v514
    %v516 = vrot.slane %v506, %v515
    %v517 = vsub.f32 %v512, %v482
    %v518 = vsub.f32 %v516, %v483
    %v519 = vlaneseq
    %v520 = vshrl.u32 %v519, 7
    %v521 = vsub.s32 0, %v520
    %v522 = vrot.slane %v497, %v521
    %v523 = vlaneseq
    %v524 = vshrl.u32 %v523, 7
    %v525 = vsub.s32 0, %v524
    %v526 = vrot.slane %v498, %v525
    %v527 = vmul.f32 %v517, %v522
    %v528 = vmul.f32 %v518, %v526
    %v529 = vmul.f32 %v527, -0.5
    %v530 = vmul.f32 %v528, -0.5
    %v531 = vmul.f32 %v529, %v527
    %v532 = vmul.f32 %v530, %v528
    %v533 = vlog2.pop %v495
    %v534 = vmul.f32 %v533, 0.6931472
    %v535 = vlog2.pop %v496
    %v536 = vmul.f32 %v535, 0.6931472
    %v537 = vlaneseq
    %v538 = vshrl.u32 %v537, 7
    %v539 = vsub.s32 0, %v538
    %v540 = vrot.slane %v534, %v539
    %v541 = vlaneseq
    %v542 = vshrl.u32 %v541, 7
    %v543 = vsub.s32 0, %v542
    %v544 = vrot.slane %v536, %v543
    %v545 = vsub.f32 %v531, %v540
    %v546 = vsub.f32 %v532, %v544
    %v547 = vsub.f32 %v545, 0.9189385
    %v548 = vsub.f32 %v546, 0.9189385
    %v549 = vsel %vm350, 1, 0
    %v550 = vsel %vm351, 1, 0
    %vm551 = vcmp.eq.s32.totalorder %v549, 1
    %vm552 = vcmp.eq.s32.totalorder %v550, 1
    %v553 = vsel %vm551, %v547, 0.0
    %v554 = vsel %vm552, %v548, 0.0
    %v555 = vlaneseq
    %v556 = vshrl.u32 %v555, 7
    %v557 = vsub.s32 3, %v556
    %v558 = vrot.slane %v338, %v557
    %v559 = vlaneseq
    %v560 = vshrl.u32 %v559, 7
    %v561 = vsub.s32 7, %v560
    %v562 = vrot.slane %v338, %v561
    %v563 = vlaneseq
    %v564 = vshrl.u32 %v563, 7
    %v565 = vsub.s32 3, %v564
    %v566 = vrot.slane %v558, %v565
    %v567 = vlaneseq
    %v568 = vshrl.u32 %v567, 7
    %v569 = vsub.s32 3, %v568
    %v570 = vrot.slane %v562, %v569
    %vm571 = vcmp.eq.s32.totalorder %v353, %v566
    %vm572 = vcmp.eq.s32.totalorder %v353, %v570
    %vm573 = vmand %vm571, %vm551
    %vm574 = vmand %vm572, %vm552
    %v575 = vsel %vm573, 1, 0
    %v576 = vsel %vm574, 1, 0
    %v577 = vcvt.s32.f32 %v575
    %v578 = vcvt.s32.f32 %v576
    %v579 = vpack.c.bf16 %v577, %v577
    %v580 = vpack.c.bf16 %v578, %v578
    %v581 = vld [vmem:[%s8] sm:$0xff]
    %v582 = vpack.c.bf16 %v553, %v553
    %v583 = vpack.c.bf16 %v554, %v554
    %584 = vmatprep.subr.bf16.mxu0 %v583
    %585 = vmatpush1.bf16.xpose.msra.mxu0 %v582
    %586 = vmatprep.subr.bf16.mxu0 0
    %587 = vmatpush1.bf16.xpose.msra.mxu0 0
    %588 = vmatprep.subr.bf16.mxu0 0
    %589 = vmatpush1.bf16.xpose.msra.mxu0 0
    %590 = vmatprep.subr.bf16.mxu0 0
    %591 = vmatpush1.bf16.xpose.msra.mxu0 0
    %592 = vmatprep.subr.bf16.mxu0 0
    %593 = vmatpush1.bf16.xpose.msra.mxu0 0
    %594 = vmatprep.subr.bf16.mxu0 0
    %595 = vmatpush1.bf16.xpose.msra.mxu0 0
    %596 = vmatprep.subr.bf16.mxu0 0
    %597 = vmatpush1.bf16.xpose.msra.mxu0 0
    %598 = vmatprep.subr.bf16.mxu0 0
    %599 = vmatpush1.bf16.xpose.msra.mxu0 0
    %600 = vmatprep.subr.bf16.mxu0 0
    %601 = vmatpush1.bf16.xpose.msra.mxu0 0
    %602 = vmatprep.subr.bf16.mxu0 0
    %603 = vmatpush1.bf16.xpose.msra.mxu0 0
    %604 = vmatprep.subr.bf16.mxu0 0
    %605 = vmatpush1.bf16.xpose.msra.mxu0 0
    %606 = vmatprep.subr.bf16.mxu0 0
    %607 = vmatpush1.bf16.xpose.msra.mxu0 0
    %608 = vmatprep.subr.bf16.mxu0 0
    %609 = vmatpush1.bf16.xpose.msra.mxu0 0
    %610 = vmatprep.subr.bf16.mxu0 0
    %611 = vmatpush1.bf16.xpose.msra.mxu0 0
    %612 = vmatprep.subr.bf16.mxu0 0
    %613 = vmatpush1.bf16.xpose.msra.mxu0 0
    %614 = vmatprep.subr.bf16.mxu0 0
    %615 = vmatpush1.bf16.xpose.msra.mxu0 0
    %616 = vmatprep.mubr.bf16.mxu0 %v580
    %617 = vmatmul.mubr.bf16.gmra.mrb[0].mxu0 %v579
    %v618 = vpop.f32.mrb[0].mxu0
    %v619 = vadd.f32 0.0, %v618
    %v620 = vpop.f32.mrb[0].mxu0
    %v621 = vpop.f32.mrb[0].mxu0
    %v622 = vpop.f32.mrb[0].mxu0
    %623 = vdwg.mxu0
    %v624 = vadd.f32 %v581, %v619
    %vm625 = vcmask 64512
    %626 = vst.msk [vmem:[%s8] sm:$0xff] %vm625, %v624
    %v627 = vrot.slane %v482, 4
    %v628 = vadd.f32 %v482, %v627
    %v629 = vrot.slane %v628, 2
    %v630 = vadd.f32 %v628, %v629
    %v631 = vrot.slane %v630, 1
    %v632 = vadd.f32 %v630, %v631
    %v633 = vrot.slane %v483, 4
    %v634 = vadd.f32 %v483, %v633
    %v635 = vrot.slane %v634, 2
    %v636 = vadd.f32 %v634, %v635
    %v637 = vrot.slane %v636, 1
    %v638 = vadd.f32 %v636, %v637
    %v639 = vrcp.pop 8.0
    %v640 = vmul.f32 %v632, %v639
    %v641 = vmul.f32 %v638, %v639
    %v644 = vcombine.low %v640, %v641
    %v646 = vunpack.c.l.s4 1966171168
    %v647 = vunpack.c.0.s8 %v646
    %v648 = vlaneseq
    %v649 = vshrl.u32 %v648, 7
    %v650 = vsub.s32 %v647, %v649
    %v651 = vrot.slane %v644, %v650
    %v653 = vunpack.c.l.s4 1966171168
    %v654 = vunpack.c.0.s8 %v653
    %v655 = vlaneseq
    %v656 = vshrl.u32 %v655, 7
    %v657 = vsub.s32 %v654, %v656
    %v658 = vrot.slane %v651, %v657
    %v660 = vlaneseq
    %vm661 = vcmp.ge.s32.totalorder %v660, 0
    %vm662 = vcmp.lt.s32.totalorder %v660, 256
    %vm663 = vmand %vm661, %vm662
    %664 = vst.msk [vmem:[%s119] ss:$2 sm:$0x3] %vm663, %v658
    %v667 = vcombine.low %v335, %v336
    %v669 = vunpack.c.l.s4 1966171168
    %v670 = vunpack.c.0.s8 %v669
    %v671 = vlaneseq
    %v672 = vshrl.u32 %v671, 7
    %v673 = vsub.s32 %v670, %v672
    %v674 = vrot.slane %v667, %v673
    %v675 = vcombine.high %v674, %v674
    %v677 = vunpack.c.l.s4 1966171168
    %v678 = vunpack.c.0.s8 %v677
    %v679 = vlaneseq
    %v680 = vshrl.u32 %v679, 7
    %v681 = vsub.s32 %v678, %v680
    %v682 = vrot.slane %v675, %v681
    %s684 = scalar_lea.vmem %s119, 1
    %685 = vst.msk [vmem:[%s684] ss:$2 sm:$0x3] %vm663, %v682
    %s686 = sadd.s32 0, 0
    %s687 = smul.u32 2, %s686
    %p688 = scmp.lt.s32.totalorder %s687, 1
    %s689 = scalar_select %p688, %s687, 1
    %s690 = smul.addr %s689, 2
    %s691 = scalar_lea.vmem %s7, %s690
    // Predicated region
    $region38: #{merging_forward.1} parent=1 // pred_check
      _
    $region39: #{merging_forward.1} parent=1 // pred_check_branch
      %693 = sbr.rel (0) target = $region41
    $region40: #{merging_forward.1} parent=1 // pred_region
      %s694 = sadd.s32 0, 0
      %s695 = smul.u32 2, %s694
    $region41: #{merging_forward.1} parent=1 // pred_fallthru
      _
    // Predicated region
    $region42: #{merging_forward.1} parent=1 // pred_check
      _
    $region43: #{merging_forward.1} parent=1 // pred_check_branch
      %697 = sbr.rel (0) target = $region45
    $region44: #{merging_forward.1} parent=1 // pred_region
      _
    $region45: #{merging_forward.1} parent=1 // pred_fallthru
      _
    // Predicated region
    $region46: #{merging_forward.1} parent=1 // pred_check
      _
    $region47: #{merging_forward.1} parent=1 // pred_check_branch
      %699 = sbr.rel (0) target = $region49
    $region48: #{merging_forward.1} parent=1 // pred_region
      %s700 = sadd.s32 0, 0
      %s701 = smul.u32 2, %s700
      %p702 = scmp.lt.s32.totalorder %s701, 1
      %s703 = scalar_select %p702, %s701, 1
      %s704 = smul.addr %s703, 2
      %s705 = scalar_lea.vmem %s7, %s704
    $region49: #{merging_forward.1} parent=1 // pred_fallthru
      _
    // Predicated region
    $region50: #{merging_forward.1} parent=1 // pred_check
      _
    $region51: #{merging_forward.1} parent=1 // pred_check_branch
      %707 = sbr.rel (0) target = $region53
    $region52: #{merging_forward.1} parent=1 // pred_region
      _
    $region53: #{merging_forward.1} parent=1 // pred_fallthru
      _
    %708 = vsyncpa [#allocation4], 1

</llo_original>
